<compile_context>
chip_gen: v5e
topology: v5e:2x2
jax: 0.10.0
libtpu: 0.0.40
codegen_flags: <defaults>
</compile_context>

<pallas_src>
import jax
import jax.numpy as jnp
from jax.experimental import pallas as pl
from jax.experimental.pallas import tpu as pltpu

_SUBLANE = 8
_N_PAD = 8     # N=2 padded up to one sublane group; output writeback = 32 B/row.
_SPLIT = 4     # target >= 4 grid steps (>=2 per TensorCore on v7x).


def _round_up(v, m):
    return ((v + m - 1) // m) * m


def _tile_config():
    """(tm_max, vmem_limit_bytes) gated per TPU generation."""
    try:
        kind = jax.devices()[0].device_kind.lower()
    except Exception:  # defensive fallback
        kind = ""
    if "v6" in kind:   # 128 MiB VMEM, ~1.4 TB/s: big tiles amortize per-step cost
        return 8192, 100 << 20
    if "v7" in kind:   # 64 MiB VMEM per TC, 2 TCs: mid tiles + multi-step split
        return 4096, 56 << 20
    # v5e (16 MiB scoped default -> the explicit raise matters) and unknown chips.
    return 2048, 40 << 20


def _vnn_linear_kernel(x_ref, w_ref, b_ref, o_ref):
    # x_ref: (TM, K), w_ref: (K, N_PAD), b_ref: (1, N_PAD), o_ref: (TM, N_PAD)
    acc = jnp.dot(x_ref[...], w_ref[...], preferred_element_type=jnp.float32)
    o_ref[...] = (acc + b_ref[...]).astype(o_ref.dtype)


def prepare_vnn_params(weight, bias, dtype=jnp.float32):
    """Hoistable param prep: W (N,K) -> padded W^T (K,8), bias (N,) -> (1,8)."""
    n, k = weight.shape
    w_pad = jnp.zeros((k, _N_PAD), dtype).at[:, :n].set(weight.T.astype(dtype))
    b_pad = jnp.zeros((1, _N_PAD), dtype).at[:, :n].set(bias.astype(dtype))
    return w_pad, b_pad, n


def vnn_apply(x, w_pad, b_pad, n_out):
    """y[..., :n_out] = x @ W^T + b with prepared/padded params."""
    lead = x.shape[:-1]
    k = x.shape[-1]
    x2 = x.reshape(-1, k)
    b_rows = x2.shape[0]
    out_rows = _round_up(b_rows, _SUBLANE)   # pad rows to a multiple of 8 ONLY

    tm_max, vmem_limit = _tile_config()
    # Tile rows: multiple of 8, capped per generation, split so the grid has
    # several steps (two-TensorCore sharding on v7x + pipeline overlap).
    tm = min(tm_max, max(_SUBLANE, _round_up(pl.cdiv(b_rows, _SPLIT), _SUBLANE)))
    grid = pl.cdiv(out_rows, tm)

    isz = jnp.dtype(x2.dtype).itemsize
    cost = pl.CostEstimate(
        flops=2 * (grid * tm) * k * _N_PAD,
        transcendentals=0,
        bytes_accessed=(b_rows * k + k * _N_PAD + out_rows * _N_PAD) * isz,
    )

    out = pl.pallas_call(
        _vnn_linear_kernel,
        out_shape=jax.ShapeDtypeStruct((out_rows, _N_PAD), x2.dtype),
        grid_spec=pl.GridSpec(
            grid=(grid,),
            in_specs=[
                pl.BlockSpec((tm, k), lambda i: (i, 0)),       # streamed x tiles
                pl.BlockSpec((k, _N_PAD), lambda i: (0, 0)),   # resident weights
                pl.BlockSpec((1, _N_PAD), lambda i: (0, 0)),   # resident bias
            ],
            out_specs=pl.BlockSpec((tm, _N_PAD), lambda i: (i, 0)),
        ),
        compiler_params=pltpu.CompilerParams(
            dimension_semantics=("parallel",),
            vmem_limit_bytes=vmem_limit,
        ),
        cost_estimate=cost,
    )(x2, w_pad, b_pad)

    # Drop the (<=7) padded rows and the zero-padded output columns.
    return out[:b_rows, :n_out].reshape(*lead, n_out)


def vnn_forward(x, weight, bias):
    """One-shot convenience wrapper: y = x @ weight.T + bias (PyTorch Linear)."""
    w_pad, b_pad, n_out = prepare_vnn_params(weight, bias, x.dtype)
    return vnn_apply(x, w_pad, b_pad, n_out)


if __name__ == "__main__":
    bottleneck_size = 1024   # module default
    batch = 10               # small demo batch; exercises the ragged-block path
    out_features = 2

    key = jax.random.PRNGKey(0)
    kx, kw, kb = jax.random.split(key, 3)

    # Deterministic init mimicking nn.Linear's uniform(-1/sqrt(K), 1/sqrt(K)).
    bound = 1.0 / float(jnp.sqrt(jnp.float32(bottleneck_size)))
    weight = jax.random.uniform(
        kw, (out_features, bottleneck_size), jnp.float32, -bound, bound
    )
    bias = jax.random.uniform(kb, (out_features,), jnp.float32, -bound, bound)

    x = jax.random.normal(kx, (batch, bottleneck_size), jnp.float32)

    y = vnn_forward(x, weight, bias)
    jax.block_until_ready(y)

    # Reference check against plain JAX (same math as PyTorch Linear).
    y_ref = x @ weight.T + bias
    assert y.shape == (batch, out_features)
    assert jnp.allclose(y, y_ref, atol=1e-5, rtol=1e-5)

    print("KERNEL_OK")
</pallas_src>

<mosaic_0001>
module attributes {stable_mosaic.version = 11 : i64} {
  func.func @_vnn_linear_kernel(%arg0: i32, %arg1: memref<8x1024xf32, #tpu.memory_space<vmem>>, %arg2: memref<1024x8xf32, #tpu.memory_space<vmem>>, %arg3: memref<1x8xf32, #tpu.memory_space<vmem>>, %arg4: memref<8x8xf32, #tpu.memory_space<vmem>>) attributes {dimension_semantics = [#tpu.dimension_semantics<parallel>], iteration_bounds = array<i64: 2>, scalar_prefetch = 0 : i64, scratch_operands = 0 : i64, tpu.core_type = #tpu.core_type<tc>, window_params = [{transform_indices = @transform_0, window_bounds = array<i64: 8, 1024>}, {pipeline_mode = #tpu.pipeline_mode<synchronous>, transform_indices = @transform_1, window_bounds = array<i64: 1024, 8>}, {pipeline_mode = #tpu.pipeline_mode<synchronous>, transform_indices = @transform_2, window_bounds = array<i64: 1, 8>}, {transform_indices = @transform_3, window_bounds = array<i64: 8, 8>}]} {
    %c0 = arith.constant 0 : index
    %c0_0 = arith.constant 0 : index
    %0 = vector.load %arg1[%c0, %c0_0] : memref<8x1024xf32, #tpu.memory_space<vmem>>, vector<8x1024xf32>
    %c0_1 = arith.constant 0 : index
    %c0_2 = arith.constant 0 : index
    %1 = vector.load %arg2[%c0_1, %c0_2] : memref<1024x8xf32, #tpu.memory_space<vmem>>, vector<1024x8xf32>
    %cst = arith.constant dense<0.000000e+00> : vector<8x8xf32>
    %2 = tpu.matmul %0, %1, %cst {dimension_numbers = #tpu.dot_dimension_numbers<[1], [0], [0], [1], [0, 0, 1, 1], [], []>} : vector<8x1024xf32>, vector<1024x8xf32>, vector<8x8xf32> -> vector<8x8xf32>
    %c0_3 = arith.constant 0 : index
    %c0_4 = arith.constant 0 : index
    %3 = vector.load %arg3[%c0_3, %c0_4] : memref<1x8xf32, #tpu.memory_space<vmem>>, vector<1x8xf32>
    %4 = vector.broadcast %3 : vector<1x8xf32> to vector<8x8xf32>
    %5 = arith.addf %2, %4 : vector<8x8xf32>
    %c0_5 = arith.constant 0 : index
    %c0_6 = arith.constant 0 : index
    %6 = vector.load %arg4[%c0_5, %c0_6] : memref<8x8xf32, #tpu.memory_space<vmem>>, vector<8x8xf32>
    tpu.vector_store %arg4[%c0_5, %c0_6], %5 {strides = array<i32>} : memref<8x8xf32, #tpu.memory_space<vmem>>, vector<8x8xf32>,
    return
  }
  func.func @transform_0(%arg0: i32) -> (i32, i32) {
    %c0_i32 = arith.constant 0 : i32
    %c0_i32_0 = arith.constant 0 : i32
    return %arg0, %c0_i32 : i32, i32
  }
  func.func @transform_1(%arg0: i32) -> (i32, i32) {
    %c0_i32 = arith.constant 0 : i32
    %c0_i32_0 = arith.constant 0 : i32
    %c0_i32_1 = arith.constant 0 : i32
    return %c0_i32, %c0_i32_0 : i32, i32
  }
  func.func @transform_2(%arg0: i32) -> (i32, i32) {
    %c0_i32 = arith.constant 0 : i32
    %c0_i32_0 = arith.constant 0 : i32
    %c0_i32_1 = arith.constant 0 : i32
    return %c0_i32, %c0_i32_0 : i32, i32
  }
  func.func @transform_3(%arg0: i32) -> (i32, i32) {
    %c0_i32 = arith.constant 0 : i32
    %c0_i32_0 = arith.constant 0 : i32
    return %arg0, %c0_i32 : i32, i32
  }
}

</mosaic_0001>

<llo_original>
// kernel: tpu_custom_call.1
$region0: #{tpu_custom_call.1}
  #allocation0 [shape = 'u32[]', space=smem, size = 0x4, offset = 0x4, fixed_abs, tag = 'smem constant byte address 0x4 - core index']
  #allocation1 [shape = 'u32[72,128]{1,0:T(1,128)}', space=vmem, size = 0x9000, scoped, tag = 'internal scratch']
  %s0 = inlined_call_operand.vmem [shape: f32[10,1024], index: 0, kind: input, shape index: {}]
  %s1 = inlined_call_operand.vmem [shape: f32[1024,8], index: 1, kind: input, shape index: {}]
  %s2 = inlined_call_operand.vmem [shape: f32[1,8], index: 2, kind: input, shape index: {}]
  %s3 = inlined_call_operand.vmem [shape: f32[16,8], index: 3, kind: output, shape index: {}]
  %s4 = sld [smem:[#allocation0]]
  $region45: #{tpu_custom_call.1} parent=0
    _
  %s6 = ssub.s32 1, %s4
  %s7 = scalar_select 0, %s6, %s4
  loop: start=0, step=1, limit=4
  $region2: #{tpu_custom_call.1} parent=0 // loop_pre_header
    _
  $region3: #{tpu_custom_call.1} parent=0 // loop_header
    %s9 = sphi 0, %s13
    %p10 = scmp.ge.s32.totalorder %s9, 4
    %s19 = sphi 0, %s21
    %s22 = sphi 0, %s19
    %s23 = sphi 0, %s22
    %s39 = sphi 0, %s23
    %s43 = sphi 0, %s43
    %s45 = sphi 0, %s43
    %s46 = sphi 0, %s45
    %s60 = sphi 0, %s46
    %s64 = sphi 0, %s64
    %s66 = sphi 0, %s64
    %s67 = sphi 0, %s66
    %s81 = sphi 0, %s67
    %s87 = sphi 0, %s89
    %s90 = sphi 0, %s87
    %s91 = sphi 0, %s90
    %s107 = sphi 0, %s91
  $region4: #{tpu_custom_call.1} parent=0 // loop_header_branch
    %12 = sbr.rel (%p10) target = $region8
  $region5: #{tpu_custom_call.1} parent=0 // loop_body
    %s14 = ssub.s32 %s9, 1
    %s15 = ssub.s32 %s9, 2
    %s16 = sadd.s32 %s9, 1
    %s17 = ssub.s32 %s9, %s16
    %p18 = scmp.eq.s32.totalorder %s17, 0
    %s20 = sadd.s32 %s19, 1
    %s21 = scalar_select %p18, %s19, %s20
    %p24 = pneg %p18
    %p25 = scmp.eq.s32.totalorder %s9, 1
    %p26 = por %p24, %p25
    %p27 = scmp.ne.s32.totalorder %s19, %s22
    %p28 = scmp.eq.s32.totalorder %s9, 0
    %p29 = por %p27, %p28
    %p30 = scmp.ne.s32.totalorder %s19, %s22
    %p31 = scmp.eq.s32.totalorder %s14, 1
    %p32 = por %p30, %p31
    %p33 = scmp.ne.s32.totalorder %s22, %s23
    %p34 = scmp.eq.s32.totalorder %s14, 0
    %p35 = por %p33, %p34
    %p36 = scmp.ne.s32.totalorder %s22, %s23
    %p37 = scmp.eq.s32.totalorder %s15, 1
    %p38 = por %p36, %p37
    %p40 = scmp.ne.s32.totalorder %s23, %s39
    %p41 = scmp.eq.s32.totalorder %s15, 0
    %p42 = por %p40, %p41
    %s44 = sadd.s32 %s43, 1
    %p47 = scmp.eq.s32.totalorder %s9, 1
    %p48 = scmp.ne.s32.totalorder %s43, %s45
    %p49 = scmp.eq.s32.totalorder %s9, 0
    %p50 = por %p48, %p49
    %p51 = scmp.ne.s32.totalorder %s43, %s45
    %p52 = scmp.eq.s32.totalorder %s14, 1
    %p53 = por %p51, %p52
    %p54 = scmp.ne.s32.totalorder %s45, %s46
    %p55 = scmp.eq.s32.totalorder %s14, 0
    %p56 = por %p54, %p55
    %p57 = scmp.ne.s32.totalorder %s45, %s46
    %p58 = scmp.eq.s32.totalorder %s15, 1
    %p59 = por %p57, %p58
    %p61 = scmp.ne.s32.totalorder %s46, %s60
    %p62 = scmp.eq.s32.totalorder %s15, 0
    %p63 = por %p61, %p62
    %s65 = sadd.s32 %s64, 1
    %p68 = scmp.eq.s32.totalorder %s9, 1
    %p69 = scmp.ne.s32.totalorder %s64, %s66
    %p70 = scmp.eq.s32.totalorder %s9, 0
    %p71 = por %p69, %p70
    %p72 = scmp.ne.s32.totalorder %s64, %s66
    %p73 = scmp.eq.s32.totalorder %s14, 1
    %p74 = por %p72, %p73
    %p75 = scmp.ne.s32.totalorder %s66, %s67
    %p76 = scmp.eq.s32.totalorder %s14, 0
    %p77 = por %p75, %p76
    %p78 = scmp.ne.s32.totalorder %s66, %s67
    %p79 = scmp.eq.s32.totalorder %s15, 1
    %p80 = por %p78, %p79
    %p82 = scmp.ne.s32.totalorder %s67, %s81
    %p83 = scmp.eq.s32.totalorder %s15, 0
    %p84 = por %p82, %p83
    %s85 = ssub.s32 %s9, %s16
    %p86 = scmp.eq.s32.totalorder %s85, 0
    %s88 = sadd.s32 %s87, 1
    %s89 = scalar_select %p86, %s87, %s88
    %p92 = pneg %p86
    %p93 = scmp.eq.s32.totalorder %s9, 1
    %p94 = por %p92, %p93
    %p95 = scmp.ne.s32.totalorder %s87, %s90
    %p96 = scmp.eq.s32.totalorder %s9, 0
    %p97 = por %p95, %p96
    %p98 = scmp.ne.s32.totalorder %s87, %s90
    %p99 = scmp.eq.s32.totalorder %s14, 1
    %p100 = por %p98, %p99
    %p101 = scmp.ne.s32.totalorder %s90, %s91
    %p102 = scmp.eq.s32.totalorder %s14, 0
    %p103 = por %p101, %p102
    %p104 = scmp.ne.s32.totalorder %s90, %s91
    %p105 = scmp.eq.s32.totalorder %s15, 1
    %p106 = por %p104, %p105
    %p108 = scmp.ne.s32.totalorder %s91, %s107
    %p109 = scmp.eq.s32.totalorder %s15, 0
    %p110 = por %p108, %p109
    %p111 = scmp.le.s32.totalorder 1, %s9
    %p112 = scmp.lt.s32.totalorder %s9, 3
    %p113 = pnand %p111, %p112
    %p114 = pneg %p113
    // Predicated region
    $region9: #{tpu_custom_call.1} parent=5 // pred_check
      _
    $region10: #{tpu_custom_call.1} parent=5 // pred_check_branch
      %116 = sbr.rel (%p113) target = $region12
    $region11: #{tpu_custom_call.1} parent=5 // pred_region
      %s117 = ssub.s32 %s9, 1
      // Predicated region
      $region13: #{tpu_custom_call.1} parent=11 // pred_check
        %p118 = pneg %p56
      $region14: #{tpu_custom_call.1} parent=11 // pred_check_branch
        %120 = sbr.rel (%p118) target = $region16
      $region15: #{tpu_custom_call.1} parent=11 // pred_region
        _
      $region16: #{tpu_custom_call.1} parent=11 // pred_fallthru
        _
      // Predicated region
      $region17: #{tpu_custom_call.1} parent=11 // pred_check
        %p121 = pneg %p77
      $region18: #{tpu_custom_call.1} parent=11 // pred_check_branch
        %123 = sbr.rel (%p121) target = $region20
      $region19: #{tpu_custom_call.1} parent=11 // pred_region
        _
      $region20: #{tpu_custom_call.1} parent=11 // pred_fallthru
        _
    $region12: #{tpu_custom_call.1} parent=5 // pred_fallthru
      _
    %p124 = scmp.lt.s32.totalorder %s9, 2
    // Predicated region
    $region21: #{tpu_custom_call.1} parent=5 // pred_check
      %p125 = pneg %p124
    $region22: #{tpu_custom_call.1} parent=5 // pred_check_branch
      %127 = sbr.rel (%p125) target = $region24
    $region23: #{tpu_custom_call.1} parent=5 // pred_region
      // Predicated region
      $region25: #{tpu_custom_call.1} parent=23 // pred_check
        %p128 = pneg %p29
      $region26: #{tpu_custom_call.1} parent=23 // pred_check_branch
        %130 = sbr.rel (%p128) target = $region28
      $region27: #{tpu_custom_call.1} parent=23 // pred_region
        %p131 = scmp.lt.s32.totalorder %s9, 1
        %s132 = scalar_select %p131, %s9, 1
        %s133 = smul.addr %s132, 8
        %s134 = smul.addr %s133, 8
        %s135 = scalar_lea.vmem %s0, %s134
      $region28: #{tpu_custom_call.1} parent=23 // pred_fallthru
        _
    $region24: #{tpu_custom_call.1} parent=5 // pred_fallthru
      _
    %p136 = scmp.le.s32.totalorder 1, %s9
    %p137 = scmp.lt.s32.totalorder %s9, 3
    %p138 = pnand %p136, %p137
    %p139 = pneg %p138
    // Predicated region
    $region29: #{tpu_custom_call.1} parent=5 // pred_check
      _
    $region30: #{tpu_custom_call.1} parent=5 // pred_check_branch
      %141 = sbr.rel (%p138) target = $region32
    $region31: #{tpu_custom_call.1} parent=5 // pred_region
      %s142 = ssub.s32 %s9, 1
      %p143 = scmp.lt.s32.totalorder %s14, 1
      %s144 = scalar_select %p143, %s14, 1
      %s145 = smul.addr %s144, 8
      %s146 = smul.addr %s145, 8
      %s147 = scalar_lea.vmem %s0, %s146
      %p148 = pneg %p35
      %p149 = pneg %p32
      %p150 = pneg %p56
      %p151 = pneg %p53
      %p152 = pneg %p77
      %p153 = pneg %p74
      %p154 = pneg %p103
      %p155 = pneg %p100
      %p156 = scmp.lt.s32.totalorder %s14, 1
      %s157 = scalar_select %p156, %s14, 1
      %s158 = smul.addr %s157, 8
      %s159 = scalar_lea.vmem %s3, %s158
      %p160 = scmp.lt.s32.totalorder %s14, 1
      %s161 = scalar_select %p160, %s14, 1
      %s162 = smul.addr %s161, 8
      %s163 = smul.addr %s162, 8
      %s164 = scalar_lea.vmem %s0, %s163
      %p165 = scmp.lt.s32.totalorder %s14, 1
      %s166 = scalar_select %p165, %s14, 1
      %s167 = smul.addr %s166, 8
      %s168 = scalar_lea.vmem %s3, %s167
      %v169 = vld [vmem:[%s164] sm:$0xff]
      %v170 = vld [vmem:[%s164 + $0x8] sm:$0xff]
      %v171 = vld [vmem:[%s164 + $0x10] sm:$0xff]
      %v172 = vld [vmem:[%s164 + $0x18] sm:$0xff]
      %v173 = vld [vmem:[%s164 + $0x20] sm:$0xff]
      %v174 = vld [vmem:[%s164 + $0x28] sm:$0xff]
      %v175 = vld [vmem:[%s164 + $0x30] sm:$0xff]
      %v176 = vld [vmem:[%s164 + $0x38] sm:$0xff]
      %v177 = vld [vmem:[%s1] sm:$0xff]
      %v178 = vld [vmem:[%s1 + $0x8] sm:$0xff]
      %v179 = vld [vmem:[%s1 + $0x10] sm:$0xff]
      %v180 = vld [vmem:[%s1 + $0x18] sm:$0xff]
      %v181 = vld [vmem:[%s1 + $0x20] sm:$0xff]
      %v182 = vld [vmem:[%s1 + $0x28] sm:$0xff]
      %v183 = vld [vmem:[%s1 + $0x30] sm:$0xff]
      %v184 = vld [vmem:[%s1 + $0x38] sm:$0xff]
      %v185 = vld [vmem:[%s1 + $0x40] sm:$0xff]
      %v186 = vld [vmem:[%s1 + $0x48] sm:$0xff]
      %v187 = vld [vmem:[%s1 + $0x50] sm:$0xff]
      %v188 = vld [vmem:[%s1 + $0x58] sm:$0xff]
      %v189 = vld [vmem:[%s1 + $0x60] sm:$0xff]
      %v190 = vld [vmem:[%s1 + $0x68] sm:$0xff]
      %v191 = vld [vmem:[%s1 + $0x70] sm:$0xff]
      %v192 = vld [vmem:[%s1 + $0x78] sm:$0xff]
      %v193 = vld [vmem:[%s1 + $0x80] sm:$0xff]
      %v194 = vld [vmem:[%s1 + $0x88] sm:$0xff]
      %v195 = vld [vmem:[%s1 + $0x90] sm:$0xff]
      %v196 = vld [vmem:[%s1 + $0x98] sm:$0xff]
      %v197 = vld [vmem:[%s1 + $0xa0] sm:$0xff]
      %v198 = vld [vmem:[%s1 + $0xa8] sm:$0xff]
      %v199 = vld [vmem:[%s1 + $0xb0] sm:$0xff]
      %v200 = vld [vmem:[%s1 + $0xb8] sm:$0xff]
      %v201 = vld [vmem:[%s1 + $0xc0] sm:$0xff]
      %v202 = vld [vmem:[%s1 + $0xc8] sm:$0xff]
      %v203 = vld [vmem:[%s1 + $0xd0] sm:$0xff]
      %v204 = vld [vmem:[%s1 + $0xd8] sm:$0xff]
      %v205 = vld [vmem:[%s1 + $0xe0] sm:$0xff]
      %v206 = vld [vmem:[%s1 + $0xe8] sm:$0xff]
      %v207 = vld [vmem:[%s1 + $0xf0] sm:$0xff]
      %v208 = vld [vmem:[%s1 + $0xf8] sm:$0xff]
      %v209 = vld [vmem:[%s1 + $0x100] sm:$0xff]
      %v210 = vld [vmem:[%s1 + $0x108] sm:$0xff]
      %v211 = vld [vmem:[%s1 + $0x110] sm:$0xff]
      %v212 = vld [vmem:[%s1 + $0x118] sm:$0xff]
      %v213 = vld [vmem:[%s1 + $0x120] sm:$0xff]
      %v214 = vld [vmem:[%s1 + $0x128] sm:$0xff]
      %v215 = vld [vmem:[%s1 + $0x130] sm:$0xff]
      %v216 = vld [vmem:[%s1 + $0x138] sm:$0xff]
      %v217 = vld [vmem:[%s1 + $0x140] sm:$0xff]
      %v218 = vld [vmem:[%s1 + $0x148] sm:$0xff]
      %v219 = vld [vmem:[%s1 + $0x150] sm:$0xff]
      %v220 = vld [vmem:[%s1 + $0x158] sm:$0xff]
      %v221 = vld [vmem:[%s1 + $0x160] sm:$0xff]
      %v222 = vld [vmem:[%s1 + $0x168] sm:$0xff]
      %v223 = vld [vmem:[%s1 + $0x170] sm:$0xff]
      %v224 = vld [vmem:[%s1 + $0x178] sm:$0xff]
      %v225 = vld [vmem:[%s1 + $0x180] sm:$0xff]
      %v226 = vld [vmem:[%s1 + $0x188] sm:$0xff]
      %v227 = vld [vmem:[%s1 + $0x190] sm:$0xff]
      %v228 = vld [vmem:[%s1 + $0x198] sm:$0xff]
      %v229 = vld [vmem:[%s1 + $0x1a0] sm:$0xff]
      %v230 = vld [vmem:[%s1 + $0x1a8] sm:$0xff]
      %v231 = vld [vmem:[%s1 + $0x1b0] sm:$0xff]
      %v232 = vld [vmem:[%s1 + $0x1b8] sm:$0xff]
      %v233 = vld [vmem:[%s1 + $0x1c0] sm:$0xff]
      %v234 = vld [vmem:[%s1 + $0x1c8] sm:$0xff]
      %v235 = vld [vmem:[%s1 + $0x1d0] sm:$0xff]
      %v236 = vld [vmem:[%s1 + $0x1d8] sm:$0xff]
      %v237 = vld [vmem:[%s1 + $0x1e0] sm:$0xff]
      %v238 = vld [vmem:[%s1 + $0x1e8] sm:$0xff]
      %v239 = vld [vmem:[%s1 + $0x1f0] sm:$0xff]
      %v240 = vld [vmem:[%s1 + $0x1f8] sm:$0xff]
      %v241 = vld [vmem:[%s1 + $0x200] sm:$0xff]
      %v242 = vld [vmem:[%s1 + $0x208] sm:$0xff]
      %v243 = vld [vmem:[%s1 + $0x210] sm:$0xff]
      %v244 = vld [vmem:[%s1 + $0x218] sm:$0xff]
      %v245 = vld [vmem:[%s1 + $0x220] sm:$0xff]
      %v246 = vld [vmem:[%s1 + $0x228] sm:$0xff]
      %v247 = vld [vmem:[%s1 + $0x230] sm:$0xff]
      %v248 = vld [vmem:[%s1 + $0x238] sm:$0xff]
      %v249 = vld [vmem:[%s1 + $0x240] sm:$0xff]
      %v250 = vld [vmem:[%s1 + $0x248] sm:$0xff]
      %v251 = vld [vmem:[%s1 + $0x250] sm:$0xff]
      %v252 = vld [vmem:[%s1 + $0x258] sm:$0xff]
      %v253 = vld [vmem:[%s1 + $0x260] sm:$0xff]
      %v254 = vld [vmem:[%s1 + $0x268] sm:$0xff]
      %v255 = vld [vmem:[%s1 + $0x270] sm:$0xff]
      %v256 = vld [vmem:[%s1 + $0x278] sm:$0xff]
      %v257 = vld [vmem:[%s1 + $0x280] sm:$0xff]
      %v258 = vld [vmem:[%s1 + $0x288] sm:$0xff]
      %v259 = vld [vmem:[%s1 + $0x290] sm:$0xff]
      %v260 = vld [vmem:[%s1 + $0x298] sm:$0xff]
      %v261 = vld [vmem:[%s1 + $0x2a0] sm:$0xff]
      %v262 = vld [vmem:[%s1 + $0x2a8] sm:$0xff]
      %v263 = vld [vmem:[%s1 + $0x2b0] sm:$0xff]
      %v264 = vld [vmem:[%s1 + $0x2b8] sm:$0xff]
      %v265 = vld [vmem:[%s1 + $0x2c0] sm:$0xff]
      %v266 = vld [vmem:[%s1 + $0x2c8] sm:$0xff]
      %v267 = vld [vmem:[%s1 + $0x2d0] sm:$0xff]
      %v268 = vld [vmem:[%s1 + $0x2d8] sm:$0xff]
      %v269 = vld [vmem:[%s1 + $0x2e0] sm:$0xff]
      %v270 = vld [vmem:[%s1 + $0x2e8] sm:$0xff]
      %v271 = vld [vmem:[%s1 + $0x2f0] sm:$0xff]
      %v272 = vld [vmem:[%s1 + $0x2f8] sm:$0xff]
      %v273 = vld [vmem:[%s1 + $0x300] sm:$0xff]
      %v274 = vld [vmem:[%s1 + $0x308] sm:$0xff]
      %v275 = vld [vmem:[%s1 + $0x310] sm:$0xff]
      %v276 = vld [vmem:[%s1 + $0x318] sm:$0xff]
      %v277 = vld [vmem:[%s1 + $0x320] sm:$0xff]
      %v278 = vld [vmem:[%s1 + $0x328] sm:$0xff]
      %v279 = vld [vmem:[%s1 + $0x330] sm:$0xff]
      %v280 = vld [vmem:[%s1 + $0x338] sm:$0xff]
      %v281 = vld [vmem:[%s1 + $0x340] sm:$0xff]
      %v282 = vld [vmem:[%s1 + $0x348] sm:$0xff]
      %v283 = vld [vmem:[%s1 + $0x350] sm:$0xff]
      %v284 = vld [vmem:[%s1 + $0x358] sm:$0xff]
      %v285 = vld [vmem:[%s1 + $0x360] sm:$0xff]
      %v286 = vld [vmem:[%s1 + $0x368] sm:$0xff]
      %v287 = vld [vmem:[%s1 + $0x370] sm:$0xff]
      %v288 = vld [vmem:[%s1 + $0x378] sm:$0xff]
      %v289 = vld [vmem:[%s1 + $0x380] sm:$0xff]
      %v290 = vld [vmem:[%s1 + $0x388] sm:$0xff]
      %v291 = vld [vmem:[%s1 + $0x390] sm:$0xff]
      %v292 = vld [vmem:[%s1 + $0x398] sm:$0xff]
      %v293 = vld [vmem:[%s1 + $0x3a0] sm:$0xff]
      %v294 = vld [vmem:[%s1 + $0x3a8] sm:$0xff]
      %v295 = vld [vmem:[%s1 + $0x3b0] sm:$0xff]
      %v296 = vld [vmem:[%s1 + $0x3b8] sm:$0xff]
      %v297 = vld [vmem:[%s1 + $0x3c0] sm:$0xff]
      %v298 = vld [vmem:[%s1 + $0x3c8] sm:$0xff]
      %v299 = vld [vmem:[%s1 + $0x3d0] sm:$0xff]
      %v300 = vld [vmem:[%s1 + $0x3d8] sm:$0xff]
      %v301 = vld [vmem:[%s1 + $0x3e0] sm:$0xff]
      %v302 = vld [vmem:[%s1 + $0x3e8] sm:$0xff]
      %v303 = vld [vmem:[%s1 + $0x3f0] sm:$0xff]
      %v304 = vld [vmem:[%s1 + $0x3f8] sm:$0xff]
      %v305 = vld [vmem:[%s2] sm:$0x1]
      %v307 = vperm.slane %v305, 0
      %309 = vmatpush.msra.mxu0 %v192
      %310 = vmatpush.msra.mxu0 %v191
      %311 = vmatpush.msra.mxu0 %v190
      %312 = vmatpush.msra.mxu0 %v189
      %313 = vmatpush.msra.mxu0 %v188
      %314 = vmatpush.msra.mxu0 %v187
      %315 = vmatpush.msra.mxu0 %v186
      %316 = vmatpush.msra.mxu0 %v185
      %317 = vmatpush.msra.mxu0 %v184
      %318 = vmatpush.msra.mxu0 %v183
      %319 = vmatpush.msra.mxu0 %v182
      %320 = vmatpush.msra.mxu0 %v181
      %321 = vmatpush.msra.mxu0 %v180
      %322 = vmatpush.msra.mxu0 %v179
      %323 = vmatpush.msra.mxu0 %v178
      %324 = vmatpush.msra.mxu0 %v177
      %325 = vmatmul.f32.gmra.mxu0 %v169
      %v326 = vpop.f32.mrf.mxu0
      %v327 = vadd.f32 %v307, %v326
      %328 = vdwg.mxu0
      %329 = vmatpush.msra.mxu0 %v208
      %330 = vmatpush.msra.mxu0 %v207
      %331 = vmatpush.msra.mxu0 %v206
      %332 = vmatpush.msra.mxu0 %v205
      %333 = vmatpush.msra.mxu0 %v204
      %334 = vmatpush.msra.mxu0 %v203
      %335 = vmatpush.msra.mxu0 %v202
      %336 = vmatpush.msra.mxu0 %v201
      %337 = vmatpush.msra.mxu0 %v200
      %338 = vmatpush.msra.mxu0 %v199
      %339 = vmatpush.msra.mxu0 %v198
      %340 = vmatpush.msra.mxu0 %v197
      %341 = vmatpush.msra.mxu0 %v196
      %342 = vmatpush.msra.mxu0 %v195
      %343 = vmatpush.msra.mxu0 %v194
      %344 = vmatpush.msra.mxu0 %v193
      %345 = vmatmul.f32.gmra.mxu0 %v170
      %v346 = vpop.f32.mrf.mxu0
      %v347 = vadd.f32 %v327, %v346
      %348 = vdwg.mxu0
      %349 = vmatpush.msra.mxu0 %v224
      %350 = vmatpush.msra.mxu0 %v223
      %351 = vmatpush.msra.mxu0 %v222
      %352 = vmatpush.msra.mxu0 %v221
      %353 = vmatpush.msra.mxu0 %v220
      %354 = vmatpush.msra.mxu0 %v219
      %355 = vmatpush.msra.mxu0 %v218
      %356 = vmatpush.msra.mxu0 %v217
      %357 = vmatpush.msra.mxu0 %v216
      %358 = vmatpush.msra.mxu0 %v215
      %359 = vmatpush.msra.mxu0 %v214
      %360 = vmatpush.msra.mxu0 %v213
      %361 = vmatpush.msra.mxu0 %v212
      %362 = vmatpush.msra.mxu0 %v211
      %363 = vmatpush.msra.mxu0 %v210
      %364 = vmatpush.msra.mxu0 %v209
      %365 = vmatmul.f32.gmra.mxu0 %v171
      %v366 = vpop.f32.mrf.mxu0
      %v367 = vadd.f32 %v347, %v366
      %368 = vdwg.mxu0
      %369 = vmatpush.msra.mxu0 %v240
      %370 = vmatpush.msra.mxu0 %v239
      %371 = vmatpush.msra.mxu0 %v238
      %372 = vmatpush.msra.mxu0 %v237
      %373 = vmatpush.msra.mxu0 %v236
      %374 = vmatpush.msra.mxu0 %v235
      %375 = vmatpush.msra.mxu0 %v234
      %376 = vmatpush.msra.mxu0 %v233
      %377 = vmatpush.msra.mxu0 %v232
      %378 = vmatpush.msra.mxu0 %v231
      %379 = vmatpush.msra.mxu0 %v230
      %380 = vmatpush.msra.mxu0 %v229
      %381 = vmatpush.msra.mxu0 %v228
      %382 = vmatpush.msra.mxu0 %v227
      %383 = vmatpush.msra.mxu0 %v226
      %384 = vmatpush.msra.mxu0 %v225
      %385 = vmatmul.f32.gmra.mxu0 %v172
      %v386 = vpop.f32.mrf.mxu0
      %v387 = vadd.f32 %v367, %v386
      %388 = vdwg.mxu0
      %389 = vmatpush.msra.mxu0 %v256
      %390 = vmatpush.msra.mxu0 %v255
      %391 = vmatpush.msra.mxu0 %v254
      %392 = vmatpush.msra.mxu0 %v253
      %393 = vmatpush.msra.mxu0 %v252
      %394 = vmatpush.msra.mxu0 %v251
      %395 = vmatpush.msra.mxu0 %v250
      %396 = vmatpush.msra.mxu0 %v249
      %397 = vmatpush.msra.mxu0 %v248
      %398 = vmatpush.msra.mxu0 %v247
      %399 = vmatpush.msra.mxu0 %v246
      %400 = vmatpush.msra.mxu0 %v245
      %401 = vmatpush.msra.mxu0 %v244
      %402 = vmatpush.msra.mxu0 %v243
      %403 = vmatpush.msra.mxu0 %v242
      %404 = vmatpush.msra.mxu0 %v241
      %405 = vmatmul.f32.gmra.mxu0 %v173
      %v406 = vpop.f32.mrf.mxu0
      %v407 = vadd.f32 %v387, %v406
      %408 = vdwg.mxu0
      %409 = vmatpush.msra.mxu0 %v272
      %410 = vmatpush.msra.mxu0 %v271
      %411 = vmatpush.msra.mxu0 %v270
      %412 = vmatpush.msra.mxu0 %v269
      %413 = vmatpush.msra.mxu0 %v268
      %414 = vmatpush.msra.mxu0 %v267
      %415 = vmatpush.msra.mxu0 %v266
      %416 = vmatpush.msra.mxu0 %v265
      %417 = vmatpush.msra.mxu0 %v264
      %418 = vmatpush.msra.mxu0 %v263
      %419 = vmatpush.msra.mxu0 %v262
      %420 = vmatpush.msra.mxu0 %v261
      %421 = vmatpush.msra.mxu0 %v260
      %422 = vmatpush.msra.mxu0 %v259
      %423 = vmatpush.msra.mxu0 %v258
      %424 = vmatpush.msra.mxu0 %v257
      %425 = vmatmul.f32.gmra.mxu0 %v174
      %v426 = vpop.f32.mrf.mxu0
      %v427 = vadd.f32 %v407, %v426
      %428 = vdwg.mxu0
      %429 = vmatpush.msra.mxu0 %v288
      %430 = vmatpush.msra.mxu0 %v287
      %431 = vmatpush.msra.mxu0 %v286
      %432 = vmatpush.msra.mxu0 %v285
      %433 = vmatpush.msra.mxu0 %v284
      %434 = vmatpush.msra.mxu0 %v283
      %435 = vmatpush.msra.mxu0 %v282
      %436 = vmatpush.msra.mxu0 %v281
      %437 = vmatpush.msra.mxu0 %v280
      %438 = vmatpush.msra.mxu0 %v279
      %439 = vmatpush.msra.mxu0 %v278
      %440 = vmatpush.msra.mxu0 %v277
      %441 = vmatpush.msra.mxu0 %v276
      %442 = vmatpush.msra.mxu0 %v275
      %443 = vmatpush.msra.mxu0 %v274
      %444 = vmatpush.msra.mxu0 %v273
      %445 = vmatmul.f32.gmra.mxu0 %v175
      %v446 = vpop.f32.mrf.mxu0
      %v447 = vadd.f32 %v427, %v446
      %448 = vdwg.mxu0
      %449 = vmatpush.msra.mxu0 %v304
      %450 = vmatpush.msra.mxu0 %v303
      %451 = vmatpush.msra.mxu0 %v302
      %452 = vmatpush.msra.mxu0 %v301
      %453 = vmatpush.msra.mxu0 %v300
      %454 = vmatpush.msra.mxu0 %v299
      %455 = vmatpush.msra.mxu0 %v298
      %456 = vmatpush.msra.mxu0 %v297
      %457 = vmatpush.msra.mxu0 %v296
      %458 = vmatpush.msra.mxu0 %v295
      %459 = vmatpush.msra.mxu0 %v294
      %460 = vmatpush.msra.mxu0 %v293
      %461 = vmatpush.msra.mxu0 %v292
      %462 = vmatpush.msra.mxu0 %v291
      %463 = vmatpush.msra.mxu0 %v290
      %464 = vmatpush.msra.mxu0 %v289
      %465 = vmatmul.f32.gmra.mxu0 %v176
      %v466 = vpop.f32.mrf.mxu0
      %v467 = vadd.f32 %v447, %v466
      %468 = vdwg.mxu0
      %vm469 = vcmask 64512
      %470 = vst.msk [vmem:[%s168] sm:$0xff] %vm469, %v467
      %p471 = scmp.lt.s32.totalorder %s14, 1
      %s472 = scalar_select %p471, %s14, 1
      %s473 = smul.addr %s472, 8
      %s474 = scalar_lea.vmem %s3, %s473
      // Predicated region
      $region33: #{tpu_custom_call.1} parent=31 // pred_check
        %p475 = pneg %p100
      $region34: #{tpu_custom_call.1} parent=31 // pred_check_branch
        %477 = sbr.rel (%p475) target = $region36
      $region35: #{tpu_custom_call.1} parent=31 // pred_region
        _
      $region36: #{tpu_custom_call.1} parent=31 // pred_fallthru
        _
    $region32: #{tpu_custom_call.1} parent=5 // pred_fallthru
      _
    %p478 = scmp.le.s32.totalorder 2, %s9
    // Predicated region
    $region37: #{tpu_custom_call.1} parent=5 // pred_check
      %p479 = pneg %p478
    $region38: #{tpu_custom_call.1} parent=5 // pred_check_branch
      %481 = sbr.rel (%p479) target = $region40
    $region39: #{tpu_custom_call.1} parent=5 // pred_region
      %s482 = ssub.s32 %s9, 2
      // Predicated region
      $region41: #{tpu_custom_call.1} parent=39 // pred_check
        %p483 = pneg %p106
      $region42: #{tpu_custom_call.1} parent=39 // pred_check_branch
        %485 = sbr.rel (%p483) target = $region44
      $region43: #{tpu_custom_call.1} parent=39 // pred_region
        %p486 = scmp.lt.s32.totalorder %s15, 1
        %s487 = scalar_select %p486, %s15, 1
        %s488 = smul.addr %s487, 8
        %s489 = scalar_lea.vmem %s3, %s488
      $region44: #{tpu_custom_call.1} parent=39 // pred_fallthru
        _
    $region40: #{tpu_custom_call.1} parent=5 // pred_fallthru
      _
  $region6: #{tpu_custom_call.1} parent=0 // loop_footer
    %s13 = sadd.s32 1, %s9
  $region7: #{tpu_custom_call.1} parent=0 // loop_footer_branch
    %8 = sbr.rel target = $region3
  $region8: #{tpu_custom_call.1} parent=0 // loop_exit
    _

</llo_original>
